<compile_context>
chip_gen: v5e
topology: v5e:2x2
jax: 0.10.0
libtpu: 0.0.40
codegen_flags: <defaults>
</compile_context>

<pallas_src>
import jax
import jax.numpy as jnp
from jax.experimental import pallas as pl
from jax.experimental.pallas import tpu as pltpu

D_MAX = 365.0

# logical sizes from the PyTorch module
IN_F, HID, OUT_F = 2, 10, 3

# TPU-friendly padded sizes
PAD_F = 128      # lane-padded feature width (all of 2 / 10 / 3 -> 128)
TILE_B = 512     # rows per grid step (amortizes per-step pipeline overhead)


def _mlp_kernel(x_ref, w_ref, b_ref, o_ref):
    # x: (tile_b, 128) bf16 ; w: (3, 128, 128) bf16 ; b: (8, 128) f32 (rows 0..2 used)
    # Day-normalization is already folded into w[0], so x is consumed raw.
    x = x_ref[...]
    h1 = jnp.dot(x, w_ref[0], preferred_element_type=jnp.float32) + b_ref[0:1, :]
    h1 = jnp.maximum(h1, 0.0)
    h2 = jnp.dot(h1.astype(x.dtype), w_ref[1], preferred_element_type=jnp.float32) + b_ref[1:2, :]
    h2 = jnp.maximum(h2, 0.0)
    o_ref[...] = jnp.dot(h2.astype(x.dtype), w_ref[2], preferred_element_type=jnp.float32) + b_ref[2:3, :]


@jax.jit
def _run_padded(x_pad, w_packed, b_packed):
    n_pad = x_pad.shape[0]
    tile_b = min(TILE_B, n_pad)          # small batches: one tile equal to the full array
    grid = (n_pad // tile_b,)
    return pl.pallas_call(
        _mlp_kernel,
        out_shape=jax.ShapeDtypeStruct((n_pad, PAD_F), jnp.float32),
        grid=grid,
        in_specs=[
            pl.BlockSpec((tile_b, PAD_F), lambda i: (i, 0)),        # x tile (streamed)
            pl.BlockSpec((3, PAD_F, PAD_F), lambda i: (0, 0, 0)),   # packed weights (resident)
            pl.BlockSpec((8, PAD_F), lambda i: (0, 0)),             # packed biases (resident)
        ],
        out_specs=pl.BlockSpec((tile_b, PAD_F), lambda i: (i, 0)),
        compiler_params=pltpu.CompilerParams(dimension_semantics=("parallel",)),
    )(x_pad, w_packed, b_packed)


def init_params(key):
    """Deterministic init mimicking torch.nn.Linear default (U[-1/sqrt(fan_in), +])."""
    ks = jax.random.split(key, 6)

    def linear(kw, kb, fan_in, fan_out):
        bound = 1.0 / jnp.sqrt(jnp.float32(fan_in))
        w = jax.random.uniform(kw, (fan_in, fan_out), jnp.float32, -bound, bound)
        b = jax.random.uniform(kb, (fan_out,), jnp.float32, -bound, bound)
        return w, b

    w1, b1 = linear(ks[0], ks[1], IN_F, HID)
    w2, b2 = linear(ks[2], ks[3], HID, HID)
    w3, b3 = linear(ks[4], ks[5], HID, OUT_F)
    return (w1, b1), (w2, b2), (w3, b3)


def prepare_params(params):
    """One-time padding / packing / dtype cast of the parameters.

    Returns (w_packed (3,128,128) bf16, b_packed (8,128) f32).  The day-normalization
    divisor (d_max, 1) is folded into row 0 of w1, so the kernel consumes raw x.
    """
    (w1, b1), (w2, b2), (w3, b3) = params
    w1 = w1.astype(jnp.float32) * jnp.array([[1.0 / D_MAX], [1.0]], jnp.float32)

    def padw(w):
        out = jnp.zeros((PAD_F, PAD_F), jnp.float32)
        return out.at[: w.shape[0], : w.shape[1]].set(w)

    w_packed = jnp.stack(
        [padw(w1), padw(w2.astype(jnp.float32)), padw(w3.astype(jnp.float32))]
    ).astype(jnp.bfloat16)

    b_packed = jnp.zeros((8, PAD_F), jnp.float32)
    b_packed = b_packed.at[0, :HID].set(b1.astype(jnp.float32))
    b_packed = b_packed.at[1, :HID].set(b2.astype(jnp.float32))
    b_packed = b_packed.at[2, :OUT_F].set(b3.astype(jnp.float32))
    return w_packed, b_packed


def synoptic_regression_forward(x, packed_params):
    """x: (N, 2) float32 -> (N, 3) float32 (training-mode semantics of the module).

    Matches: linear3(relu(linear2(relu(linear1(x / [d_max, 1]))))).
    """
    w_packed, b_packed = packed_params
    n = x.shape[0]
    if n <= TILE_B:
        n_pad = max(8, -(-n // 8) * 8)
    else:
        n_pad = -(-n // TILE_B) * TILE_B
    x_pad = jnp.zeros((n_pad, PAD_F), jnp.bfloat16).at[:n, :IN_F].set(x.astype(jnp.bfloat16))
    out = _run_padded(x_pad, w_packed, b_packed)
    return out[:n, :OUT_F]


def reference_forward(x, params):
    """Pure-f32 math of the PyTorch module (semantic reference)."""
    (w1, b1), (w2, b2), (w3, b3) = params
    xn = x / jnp.array([D_MAX, 1.0], jnp.float32)
    h1 = jnp.maximum(xn @ w1 + b1, 0.0)
    h2 = jnp.maximum(h1 @ w2 + b2, 0.0)
    return h2 @ w3 + b3


def quantized_reference(x, packed_params):
    """Same arithmetic the kernel performs (bf16 x / weights, f32 accumulate + bias/ReLU)."""
    w_packed, b_packed = packed_params
    w = w_packed.astype(jnp.float32)
    hp = jax.lax.Precision.HIGHEST
    xq = jnp.zeros((x.shape[0], PAD_F), jnp.float32).at[:, :IN_F].set(
        x.astype(jnp.bfloat16).astype(jnp.float32))
    h1 = jnp.maximum(jnp.dot(xq, w[0], precision=hp) + b_packed[0:1, :], 0.0)
    h1 = h1.astype(jnp.bfloat16).astype(jnp.float32)
    h2 = jnp.maximum(jnp.dot(h1, w[1], precision=hp) + b_packed[1:2, :], 0.0)
    h2 = h2.astype(jnp.bfloat16).astype(jnp.float32)
    out = jnp.dot(h2, w[2], precision=hp) + b_packed[2:3, :]
    return out[:, :OUT_F]


if __name__ == "__main__":
    key = jax.random.PRNGKey(0)
    kp, kx = jax.random.split(key)
    params = init_params(kp)
    packed = prepare_params(params)          # one-time padding / packing / bf16 cast

    # inputs like (day_of_year, second_feature); batch of 2
    days = jax.random.randint(kx, (2, 1), 0, 365).astype(jnp.float32)
    feat = jax.random.normal(jax.random.fold_in(kx, 1), (2, 1), jnp.float32)
    x = jnp.concatenate([days, feat], axis=1)          # (2, 2)

    out = jax.block_until_ready(synoptic_regression_forward(x, packed))
    assert out.shape == (2, 3)
    # tight check against the exact bf16/f32 arithmetic the kernel performs
    assert jnp.allclose(out, quantized_reference(x, packed), atol=2e-2, rtol=2e-2), out
    # loose check against the pure-f32 module math (bounds bf16 quantization drift)
    assert jnp.allclose(out, reference_forward(x, params), atol=1e-1, rtol=1e-1), out

    # larger batch exercising the parallel batch grid (N > TILE_B, no silent truncation)
    kb = jax.random.fold_in(kx, 2)
    days_b = jax.random.randint(kb, (1037, 1), 0, 365).astype(jnp.float32)
    feat_b = jax.random.normal(jax.random.fold_in(kb, 1), (1037, 1), jnp.float32)
    xb = jnp.concatenate([days_b, feat_b], axis=1)     # (1037, 2)
    out_b = jax.block_until_ready(synoptic_regression_forward(xb, packed))
    assert out_b.shape == (1037, 3)
    assert jnp.allclose(out_b, quantized_reference(xb, packed), atol=2e-2, rtol=2e-2)

    # eval-mode of the torch module returns [float(b) for b in out[0]] (host-side):
    _ = [float(b) for b in out[0]]

    print("KERNEL_OK")
</pallas_src>

<mosaic_0001>
module attributes {stable_mosaic.version = 11 : i64} {
  func.func @_mlp_kernel(%arg0: i32, %arg1: memref<8x128xbf16, #tpu.memory_space<vmem>>, %arg2: memref<3x128x128xbf16, #tpu.memory_space<vmem>>, %arg3: memref<8x128xf32, #tpu.memory_space<vmem>>, %arg4: memref<8x128xf32, #tpu.memory_space<vmem>>) attributes {dimension_semantics = [#tpu.dimension_semantics<parallel>], iteration_bounds = array<i64: 1>, scalar_prefetch = 0 : i64, scratch_operands = 0 : i64, tpu.core_type = #tpu.core_type<tc>, window_params = [{transform_indices = @transform_0, window_bounds = array<i64: 8, 128>}, {pipeline_mode = #tpu.pipeline_mode<synchronous>, transform_indices = @transform_1, window_bounds = array<i64: 3, 128, 128>}, {pipeline_mode = #tpu.pipeline_mode<synchronous>, transform_indices = @transform_2, window_bounds = array<i64: 8, 128>}, {transform_indices = @transform_3, window_bounds = array<i64: 8, 128>}]} {
    %c0 = arith.constant 0 : index
    %c0_0 = arith.constant 0 : index
    %0 = vector.load %arg1[%c0, %c0_0] : memref<8x128xbf16, #tpu.memory_space<vmem>>, vector<8x128xbf16>
    %c0_1 = arith.constant 0 : index
    %c0_2 = arith.constant 0 : index
    %c0_3 = arith.constant 0 : index
    %1 = vector.load %arg2[%c0_1, %c0_2, %c0_3] : memref<3x128x128xbf16, #tpu.memory_space<vmem>>, vector<1x128x128xbf16>
    %2 = vector.shape_cast %1 : vector<1x128x128xbf16> to vector<128x128xbf16>
    %cst = arith.constant dense<0.000000e+00> : vector<8x128xf32>
    %3 = tpu.matmul %0, %2, %cst {dimension_numbers = #tpu.dot_dimension_numbers<[1], [0], [0], [1], [0, 0, 1, 1], [], []>} : vector<8x128xbf16>, vector<128x128xbf16>, vector<8x128xf32> -> vector<8x128xf32>
    %c0_4 = arith.constant 0 : index
    %c0_5 = arith.constant 0 : index
    %4 = vector.load %arg3[%c0_4, %c0_5] : memref<8x128xf32, #tpu.memory_space<vmem>>, vector<1x128xf32>
    %5 = vector.broadcast %4 : vector<1x128xf32> to vector<8x128xf32>
    %6 = arith.addf %3, %5 : vector<8x128xf32>
    %cst_6 = arith.constant 0.000000e+00 : f32
    %7 = vector.broadcast %cst_6 : f32 to vector<8x128xf32>
    %8 = arith.maximumf %6, %7 : vector<8x128xf32>
    %9 = arith.truncf %8 : vector<8x128xf32> to vector<8x128xbf16>
    %c1 = arith.constant 1 : index
    %c0_7 = arith.constant 0 : index
    %c0_8 = arith.constant 0 : index
    %10 = vector.load %arg2[%c1, %c0_7, %c0_8] : memref<3x128x128xbf16, #tpu.memory_space<vmem>>, vector<1x128x128xbf16>
    %11 = vector.shape_cast %10 : vector<1x128x128xbf16> to vector<128x128xbf16>
    %cst_9 = arith.constant dense<0.000000e+00> : vector<8x128xf32>
    %12 = tpu.matmul %9, %11, %cst_9 {dimension_numbers = #tpu.dot_dimension_numbers<[1], [0], [0], [1], [0, 0, 1, 1], [], []>} : vector<8x128xbf16>, vector<128x128xbf16>, vector<8x128xf32> -> vector<8x128xf32>
    %c1_10 = arith.constant 1 : index
    %c0_11 = arith.constant 0 : index
    %13 = vector.load %arg3[%c1_10, %c0_11] : memref<8x128xf32, #tpu.memory_space<vmem>>, vector<1x128xf32>
    %14 = vector.broadcast %13 : vector<1x128xf32> to vector<8x128xf32>
    %15 = arith.addf %12, %14 : vector<8x128xf32>
    %cst_12 = arith.constant 0.000000e+00 : f32
    %16 = vector.broadcast %cst_12 : f32 to vector<8x128xf32>
    %17 = arith.maximumf %15, %16 : vector<8x128xf32>
    %18 = arith.truncf %17 : vector<8x128xf32> to vector<8x128xbf16>
    %c2 = arith.constant 2 : index
    %c0_13 = arith.constant 0 : index
    %c0_14 = arith.constant 0 : index
    %19 = vector.load %arg2[%c2, %c0_13, %c0_14] : memref<3x128x128xbf16, #tpu.memory_space<vmem>>, vector<1x128x128xbf16>
    %20 = vector.shape_cast %19 : vector<1x128x128xbf16> to vector<128x128xbf16>
    %cst_15 = arith.constant dense<0.000000e+00> : vector<8x128xf32>
    %21 = tpu.matmul %18, %20, %cst_15 {dimension_numbers = #tpu.dot_dimension_numbers<[1], [0], [0], [1], [0, 0, 1, 1], [], []>} : vector<8x128xbf16>, vector<128x128xbf16>, vector<8x128xf32> -> vector<8x128xf32>
    %c2_16 = arith.constant 2 : index
    %c0_17 = arith.constant 0 : index
    %22 = vector.load %arg3[%c2_16, %c0_17] : memref<8x128xf32, #tpu.memory_space<vmem>>, vector<1x128xf32>
    %23 = vector.broadcast %22 : vector<1x128xf32> to vector<8x128xf32>
    %24 = arith.addf %21, %23 : vector<8x128xf32>
    %c0_18 = arith.constant 0 : index
    %c0_19 = arith.constant 0 : index
    %25 = vector.load %arg4[%c0_18, %c0_19] : memref<8x128xf32, #tpu.memory_space<vmem>>, vector<8x128xf32>
    tpu.vector_store %arg4[%c0_18, %c0_19], %24 {strides = array<i32>} : memref<8x128xf32, #tpu.memory_space<vmem>>, vector<8x128xf32>,
    return
  }
  func.func @transform_0(%arg0: i32) -> (i32, i32) {
    %c0_i32 = arith.constant 0 : i32
    %c0_i32_0 = arith.constant 0 : i32
    return %arg0, %c0_i32 : i32, i32
  }
  func.func @transform_1(%arg0: i32) -> (i32, i32, i32) {
    %c0_i32 = arith.constant 0 : i32
    %c0_i32_0 = arith.constant 0 : i32
    %c0_i32_1 = arith.constant 0 : i32
    %c0_i32_2 = arith.constant 0 : i32
    return %c0_i32, %c0_i32_0, %c0_i32_1 : i32, i32, i32
  }
  func.func @transform_2(%arg0: i32) -> (i32, i32) {
    %c0_i32 = arith.constant 0 : i32
    %c0_i32_0 = arith.constant 0 : i32
    %c0_i32_1 = arith.constant 0 : i32
    return %c0_i32, %c0_i32_0 : i32, i32
  }
  func.func @transform_3(%arg0: i32) -> (i32, i32) {
    %c0_i32 = arith.constant 0 : i32
    %c0_i32_0 = arith.constant 0 : i32
    return %arg0, %c0_i32 : i32, i32
  }
}

</mosaic_0001>

<llo_original>
// kernel: _run_padded.1
$region0: #{_run_padded.1}
  #allocation0 [shape = 'u32[]', space=smem, size = 0x4, offset = 0x4, fixed_abs, tag = 'smem constant byte address 0x4 - core index']
  #allocation1 [shape = 'u32[72,128]{1,0:T(1,128)}', space=vmem, size = 0x9000, scoped, tag = 'internal scratch']
  %s0 = inlined_call_operand.hbm [shape: bf16[8,128], index: 0, kind: input, shape index: {}]
  %s1 = inlined_call_operand.hbm [shape: bf16[3,128,128], index: 1, kind: input, shape index: {}]
  %s2 = inlined_call_operand.hbm [shape: f32[8,128], index: 2, kind: input, shape index: {}]
  %s3 = inlined_call_operand.hbm [shape: f32[8,128], index: 3, kind: output, shape index: {}]
  %s4 = sld [smem:[#allocation0]]
  $region34: #{_run_padded.1} parent=0
    _
  %s6 = ssub.s32 1, %s4
  %s7 = scalar_select 0, %s6, %s4
  $region1: #{_run_padded.1} parent=0
    #allocation2 [shape = 'u8[2048]{0}', space=vmem, size = 0x800, scoped, tag = 'input window, operand 0, single buffered']
    #allocation3 [shape = 's32[1]{0}', space=sflag, size = 0x4, scoped, tag = 'scoped memory for _run_padded.1']
    #allocation4 [shape = 's32[1]{0}', space=sflag, size = 0x4, scoped, tag = 'scoped memory for _run_padded.1']
    #allocation5 [shape = 'u8[98304]{0}', space=vmem, size = 0x18000, scoped, tag = 'input window, operand 1, single buffered']
    #allocation6 [shape = 's32[1]{0}', space=sflag, size = 0x4, scoped, tag = 'scoped memory for _run_padded.1']
    #allocation7 [shape = 'u8[4096]{0}', space=vmem, size = 0x1000, scoped, tag = 'input window, operand 2, single buffered']
    #allocation8 [shape = 'u8[4096]{0}', space=vmem, size = 0x1000, scoped, tag = 'output window, operand 0, single buffered']
    %8 = vsyncpa [#allocation3], 0
    %9 = vsyncpa [#allocation6], 0
    %10 = vsyncpa [#allocation4], 0
    // Predicated region
    $region2: #{_run_padded.1} parent=1 // pred_check
      _
    $region3: #{_run_padded.1} parent=1 // pred_check_branch
      %12 = sbr.rel (0) target = $region5
    $region4: #{_run_padded.1} parent=1 // pred_region
      %14 = vsyncadd [#allocation3], 0
      %s16 = sshll.u32 %s0, 4
      %s17 = int_to_ptr.hbm [resolvable:$true] %s16
      %s18 = sshll.u32 [#allocation2], 4
      %s19 = int_to_ptr.vmem [resolvable:$true] %s18
      %21 = dma.hbm_to_vmem [thread:$0]  %s17, 64, %s19, [#allocation3]
    $region5: #{_run_padded.1} parent=1 // pred_fallthru
      _
    // Predicated region
    $region6: #{_run_padded.1} parent=1 // pred_check
      _
    $region7: #{_run_padded.1} parent=1 // pred_check_branch
      %23 = sbr.rel (0) target = $region9
    $region8: #{_run_padded.1} parent=1 // pred_region
      %25 = vsyncadd [#allocation6], 0
      %s26 = sshll.u32 %s1, 4
      %s27 = int_to_ptr.hbm [resolvable:$true] %s26
      %s28 = sshll.u32 [#allocation5], 4
      %s29 = int_to_ptr.vmem [resolvable:$true] %s28
      %34 = dma.hbm_to_vmem [thread:$0]  %s27, 3072, %s29, [#allocation6], 64, 64, 4
    $region9: #{_run_padded.1} parent=1 // pred_fallthru
      _
    // Predicated region
    $region10: #{_run_padded.1} parent=1 // pred_check
      _
    $region11: #{_run_padded.1} parent=1 // pred_check_branch
      %36 = sbr.rel (0) target = $region13
    $region12: #{_run_padded.1} parent=1 // pred_region
      %38 = vsyncadd [#allocation6], 0
      %s40 = sshll.u32 %s2, 4
      %s41 = int_to_ptr.hbm [resolvable:$true] %s40
      %s42 = sshll.u32 [#allocation7], 4
      %s43 = int_to_ptr.vmem [resolvable:$true] %s42
      %45 = dma.hbm_to_vmem [thread:$0]  %s41, 128, %s43, [#allocation6]
    $region13: #{_run_padded.1} parent=1 // pred_fallthru
      _
    // Predicated region
    $region14: #{_run_padded.1} parent=1 // pred_check
      _
    $region15: #{_run_padded.1} parent=1 // pred_check_branch
      %47 = sbr.rel (0) target = $region17
    $region16: #{_run_padded.1} parent=1 // pred_region
      %49 = dma.done [#allocation3], 64
    $region17: #{_run_padded.1} parent=1 // pred_fallthru
      _
    // Predicated region
    $region18: #{_run_padded.1} parent=1 // pred_check
      _
    $region19: #{_run_padded.1} parent=1 // pred_check_branch
      %51 = sbr.rel (0) target = $region21
    $region20: #{_run_padded.1} parent=1 // pred_region
      %53 = dma.done [#allocation6], 3072
    $region21: #{_run_padded.1} parent=1 // pred_fallthru
      _
    // Predicated region
    $region22: #{_run_padded.1} parent=1 // pred_check
      _
    $region23: #{_run_padded.1} parent=1 // pred_check_branch
      %55 = sbr.rel (0) target = $region25
    $region24: #{_run_padded.1} parent=1 // pred_region
      %57 = dma.done [#allocation6], 128
    $region25: #{_run_padded.1} parent=1 // pred_fallthru
      _
    %v58 = vld [vmem:[#allocation2] sm:$0xf]
    %v59 = vld [vmem:[#allocation5] sm:$0xf]
    %v60 = vld [vmem:[#allocation5 + $0x4] sm:$0xf]
    %v61 = vld [vmem:[#allocation5 + $0x8] sm:$0xf]
    %v62 = vld [vmem:[#allocation5 + $0xc] sm:$0xf]
    %v63 = vld [vmem:[#allocation5 + $0x10] sm:$0xf]
    %v64 = vld [vmem:[#allocation5 + $0x14] sm:$0xf]
    %v65 = vld [vmem:[#allocation5 + $0x18] sm:$0xf]
    %v66 = vld [vmem:[#allocation5 + $0x1c] sm:$0xf]
    %v67 = vld [vmem:[#allocation5 + $0x20] sm:$0xf]
    %v68 = vld [vmem:[#allocation5 + $0x24] sm:$0xf]
    %v69 = vld [vmem:[#allocation5 + $0x28] sm:$0xf]
    %v70 = vld [vmem:[#allocation5 + $0x2c] sm:$0xf]
    %v71 = vld [vmem:[#allocation5 + $0x30] sm:$0xf]
    %v72 = vld [vmem:[#allocation5 + $0x34] sm:$0xf]
    %v73 = vld [vmem:[#allocation5 + $0x38] sm:$0xf]
    %v74 = vld [vmem:[#allocation5 + $0x3c] sm:$0xf]
    %v75 = vld [vmem:[#allocation7] sm:$0x1]
    %v76 = vperm.slane %v75, 0
    %v93 = vunpack.c.l.b16 %v59
    %v94 = vunpack.c.l.b16 %v60
    %v95 = vunpack.c.l.b16 %v61
    %v96 = vunpack.c.l.b16 %v62
    %v97 = vunpack.c.l.b16 %v63
    %v98 = vunpack.c.l.b16 %v64
    %v99 = vunpack.c.l.b16 %v65
    %v100 = vunpack.c.l.b16 %v66
    %v101 = vunpack.c.l.b16 %v67
    %v102 = vunpack.c.l.b16 %v68
    %v103 = vunpack.c.l.b16 %v69
    %v104 = vunpack.c.l.b16 %v70
    %v105 = vunpack.c.l.b16 %v71
    %v106 = vunpack.c.l.b16 %v72
    %v107 = vunpack.c.l.b16 %v73
    %v108 = vunpack.c.l.b16 %v74
    %v109 = vpack.c.b16 %v94, %v93
    %v110 = vpack.c.b16 %v96, %v95
    %v111 = vpack.c.b16 %v98, %v97
    %v112 = vpack.c.b16 %v100, %v99
    %v113 = vpack.c.b16 %v102, %v101
    %v114 = vpack.c.b16 %v104, %v103
    %v115 = vpack.c.b16 %v106, %v105
    %v116 = vpack.c.b16 %v108, %v107
    %125 = vmatpush.bf16.msra.mxu0 %v116
    %126 = vmatpush.bf16.msra.mxu0 %v115
    %127 = vmatpush.bf16.msra.mxu0 %v114
    %128 = vmatpush.bf16.msra.mxu0 %v113
    %129 = vmatpush.bf16.msra.mxu0 %v112
    %130 = vmatpush.bf16.msra.mxu0 %v111
    %131 = vmatpush.bf16.msra.mxu0 %v110
    %132 = vmatpush.bf16.msra.mxu0 %v109
    %133 = vmatmul.bf16.gmra.mxu0 %v58
    %v134 = vpop.f32.mrf.mxu0
    %v135 = vadd.f32 %v76, %v134
    %v136 = vpop.f32.mrf.mxu0
    %137 = vdwg.mxu0
    %v138 = vmax.f32 %v135, 0.0
    %v139 = vpack.c.bf16 %v138, %v138
    %s140 = scalar_lea.vmem [#allocation5], 64
    %v141 = vld [vmem:[%s140] sm:$0xf]
    %v142 = vld [vmem:[%s140 + $0x4] sm:$0xf]
    %v143 = vld [vmem:[%s140 + $0x8] sm:$0xf]
    %v144 = vld [vmem:[%s140 + $0xc] sm:$0xf]
    %v145 = vld [vmem:[%s140 + $0x10] sm:$0xf]
    %v146 = vld [vmem:[%s140 + $0x14] sm:$0xf]
    %v147 = vld [vmem:[%s140 + $0x18] sm:$0xf]
    %v148 = vld [vmem:[%s140 + $0x1c] sm:$0xf]
    %v149 = vld [vmem:[%s140 + $0x20] sm:$0xf]
    %v150 = vld [vmem:[%s140 + $0x24] sm:$0xf]
    %v151 = vld [vmem:[%s140 + $0x28] sm:$0xf]
    %v152 = vld [vmem:[%s140 + $0x2c] sm:$0xf]
    %v153 = vld [vmem:[%s140 + $0x30] sm:$0xf]
    %v154 = vld [vmem:[%s140 + $0x34] sm:$0xf]
    %v155 = vld [vmem:[%s140 + $0x38] sm:$0xf]
    %v156 = vld [vmem:[%s140 + $0x3c] sm:$0xf]
    %v157 = vld [vmem:[#allocation7 + $0x1] sm:$0x1]
    %v158 = vperm.slane %v157, 0
    %v175 = vunpack.c.l.b16 %v141
    %v176 = vunpack.c.l.b16 %v142
    %v177 = vunpack.c.l.b16 %v143
    %v178 = vunpack.c.l.b16 %v144
    %v179 = vunpack.c.l.b16 %v145
    %v180 = vunpack.c.l.b16 %v146
    %v181 = vunpack.c.l.b16 %v147
    %v182 = vunpack.c.l.b16 %v148
    %v183 = vunpack.c.l.b16 %v149
    %v184 = vunpack.c.l.b16 %v150
    %v185 = vunpack.c.l.b16 %v151
    %v186 = vunpack.c.l.b16 %v152
    %v187 = vunpack.c.l.b16 %v153
    %v188 = vunpack.c.l.b16 %v154
    %v189 = vunpack.c.l.b16 %v155
    %v190 = vunpack.c.l.b16 %v156
    %v191 = vpack.c.b16 %v176, %v175
    %v192 = vpack.c.b16 %v178, %v177
    %v193 = vpack.c.b16 %v180, %v179
    %v194 = vpack.c.b16 %v182, %v181
    %v195 = vpack.c.b16 %v184, %v183
    %v196 = vpack.c.b16 %v186, %v185
    %v197 = vpack.c.b16 %v188, %v187
    %v198 = vpack.c.b16 %v190, %v189
    %207 = vmatpush.bf16.msra.mxu0 %v198
    %208 = vmatpush.bf16.msra.mxu0 %v197
    %209 = vmatpush.bf16.msra.mxu0 %v196
    %210 = vmatpush.bf16.msra.mxu0 %v195
    %211 = vmatpush.bf16.msra.mxu0 %v194
    %212 = vmatpush.bf16.msra.mxu0 %v193
    %213 = vmatpush.bf16.msra.mxu0 %v192
    %214 = vmatpush.bf16.msra.mxu0 %v191
    %215 = vmatmul.bf16.gmra.mxu0 %v139
    %v216 = vpop.f32.mrf.mxu0
    %v217 = vadd.f32 %v158, %v216
    %v218 = vpop.f32.mrf.mxu0
    %219 = vdwg.mxu0
    %v220 = vmax.f32 %v217, 0.0
    %v221 = vpack.c.bf16 %v220, %v220
    %s222 = scalar_lea.vmem [#allocation5], 128
    %v223 = vld [vmem:[%s222] sm:$0xf]
    %v224 = vld [vmem:[%s222 + $0x4] sm:$0xf]
    %v225 = vld [vmem:[%s222 + $0x8] sm:$0xf]
    %v226 = vld [vmem:[%s222 + $0xc] sm:$0xf]
    %v227 = vld [vmem:[%s222 + $0x10] sm:$0xf]
    %v228 = vld [vmem:[%s222 + $0x14] sm:$0xf]
    %v229 = vld [vmem:[%s222 + $0x18] sm:$0xf]
    %v230 = vld [vmem:[%s222 + $0x1c] sm:$0xf]
    %v231 = vld [vmem:[%s222 + $0x20] sm:$0xf]
    %v232 = vld [vmem:[%s222 + $0x24] sm:$0xf]
    %v233 = vld [vmem:[%s222 + $0x28] sm:$0xf]
    %v234 = vld [vmem:[%s222 + $0x2c] sm:$0xf]
    %v235 = vld [vmem:[%s222 + $0x30] sm:$0xf]
    %v236 = vld [vmem:[%s222 + $0x34] sm:$0xf]
    %v237 = vld [vmem:[%s222 + $0x38] sm:$0xf]
    %v238 = vld [vmem:[%s222 + $0x3c] sm:$0xf]
    %v239 = vld [vmem:[#allocation7 + $0x2] sm:$0x1]
    %v240 = vperm.slane %v239, 0
    %v257 = vunpack.c.l.b16 %v223
    %v258 = vunpack.c.l.b16 %v224
    %v259 = vunpack.c.l.b16 %v225
    %v260 = vunpack.c.l.b16 %v226
    %v261 = vunpack.c.l.b16 %v227
    %v262 = vunpack.c.l.b16 %v228
    %v263 = vunpack.c.l.b16 %v229
    %v264 = vunpack.c.l.b16 %v230
    %v265 = vunpack.c.l.b16 %v231
    %v266 = vunpack.c.l.b16 %v232
    %v267 = vunpack.c.l.b16 %v233
    %v268 = vunpack.c.l.b16 %v234
    %v269 = vunpack.c.l.b16 %v235
    %v270 = vunpack.c.l.b16 %v236
    %v271 = vunpack.c.l.b16 %v237
    %v272 = vunpack.c.l.b16 %v238
    %v273 = vpack.c.b16 %v258, %v257
    %v274 = vpack.c.b16 %v260, %v259
    %v275 = vpack.c.b16 %v262, %v261
    %v276 = vpack.c.b16 %v264, %v263
    %v277 = vpack.c.b16 %v266, %v265
    %v278 = vpack.c.b16 %v268, %v267
    %v279 = vpack.c.b16 %v270, %v269
    %v280 = vpack.c.b16 %v272, %v271
    %289 = vmatpush.bf16.msra.mxu0 %v280
    %290 = vmatpush.bf16.msra.mxu0 %v279
    %291 = vmatpush.bf16.msra.mxu0 %v278
    %292 = vmatpush.bf16.msra.mxu0 %v277
    %293 = vmatpush.bf16.msra.mxu0 %v276
    %294 = vmatpush.bf16.msra.mxu0 %v275
    %295 = vmatpush.bf16.msra.mxu0 %v274
    %296 = vmatpush.bf16.msra.mxu0 %v273
    %297 = vmatmul.bf16.gmra.mxu0 %v221
    %v298 = vpop.f32.mrf.mxu0
    %v299 = vadd.f32 %v240, %v298
    %v300 = vpop.f32.mrf.mxu0
    %301 = vdwg.mxu0
    %302 = vst [vmem:[#allocation8] sm:$0xff] %v299
    // Predicated region
    $region26: #{_run_padded.1} parent=1 // pred_check
      _
    $region27: #{_run_padded.1} parent=1 // pred_check_branch
      %304 = sbr.rel (0) target = $region29
    $region28: #{_run_padded.1} parent=1 // pred_region
      %306 = vsyncadd [#allocation4], 0
      %s308 = sshll.u32 [#allocation8], 4
      %s309 = int_to_ptr.vmem [resolvable:$true] %s308
      %s310 = sshll.u32 %s3, 4
      %s311 = int_to_ptr.hbm [resolvable:$true] %s310
      %313 = dma.vmem_to_hbm [thread:$0]  %s309, 128, %s311, [#allocation4]
    $region29: #{_run_padded.1} parent=1 // pred_fallthru
      _
    // Predicated region
    $region30: #{_run_padded.1} parent=1 // pred_check
      _
    $region31: #{_run_padded.1} parent=1 // pred_check_branch
      %315 = sbr.rel (0) target = $region33
    $region32: #{_run_padded.1} parent=1 // pred_region
      %317 = dma.done [#allocation4], 128
    $region33: #{_run_padded.1} parent=1 // pred_fallthru
      _
    %318 = vsyncpa [#allocation3], 1
    %319 = vsyncpa [#allocation6], 1
    %320 = vsyncpa [#allocation4], 1

</llo_original>
